<compile_context>
chip_gen: v6e
topology: v6e:2x2x1
jax: 0.10.0
libtpu: 0.0.40
codegen_flags: <defaults>
</compile_context>

<pallas_src>
import jax
import jax.numpy as jnp
from jax.experimental import pallas as pl
from jax.experimental.pallas import tpu as pltpu


# ------------------------------ helpers ------------------------------------ #
def _round_up(x: int, m: int) -> int:
    return ((x + m - 1) // m) * m


def _device_tile_prefs():
    """Preferred (tm, tn, tk) per TPU generation (f32, fits scoped VMEM)."""
    kind = ""
    try:
        kind = jax.devices()[0].device_kind.lower()
    except Exception:  # pragma: no cover - CPU/interpret fallbacks
        pass
    if "v5" in kind:
        # v5e: 4x128^2 MXU, ~0.8 TB/s HBM -> moderate tiles.
        return 256, 256, 512
    if "v7" in kind:
        # v7x: 64 MiB VMEM per TC -> keep the double-buffered footprint small.
        return 256, 512, 512
    # v6e (default): 2x256^2 MXU, 128 MiB VMEM.
    return 512, 512, 1024


# ----------------------------- Pallas kernel ------------------------------- #
def _linear_bias_kernel(x_ref, wt_ref, b_ref, o_ref):
    """One (tm, tn) output tile of y = x @ W^T + b, accumulated over K.

    The output block index is independent of the K grid axis, so o_ref stays
    resident in VMEM across the whole reduction and doubles as the f32
    accumulator.  Bias is the accumulator's initial value (added once).
    """
    k = pl.program_id(2)

    @pl.when(k == 0)
    def _init():
        o_ref[...] = jnp.broadcast_to(b_ref[...], o_ref.shape)

    o_ref[...] += jnp.dot(
        x_ref[...], wt_ref[...], preferred_element_type=jnp.float32
    )


def linear_pallas(x, w_t, b):
    """x: (B, F), w_t: (F, O) (transposed torch weight), b: (O,). Returns (B, O) f32."""
    B, F = x.shape
    O = w_t.shape[1]

    tm_p, tn_p, tk_p = _device_tile_prefs()

    # Pad to (8, 128)-aligned, lane-dense shapes; then make dims divide tiles.
    Bp = _round_up(B, 8)
    Fp = _round_up(F, 128)
    Op = _round_up(O, 128)
    tm = min(tm_p, Bp)
    tn = min(tn_p, Op)
    tk = min(tk_p, Fp)
    Bp = _round_up(Bp, tm)
    Fp = _round_up(Fp, tk)
    Op = _round_up(Op, tn)

    # Zero padding: padded F-columns x padded W-rows contribute 0; padded
    # batch rows / output cols are sliced off below.
    x_p = jnp.pad(x.astype(jnp.float32), ((0, Bp - B), (0, Fp - F)))
    w_p = jnp.pad(w_t.astype(jnp.float32), ((0, Fp - F), (0, Op - O)))
    b_p = jnp.pad(b.astype(jnp.float32), ((0, Op - O),)).reshape(1, Op)

    grid = (Bp // tm, Op // tn, Fp // tk)  # (M, N, K), reduction innermost

    out_p = pl.pallas_call(
        _linear_bias_kernel,
        out_shape=jax.ShapeDtypeStruct((Bp, Op), jnp.float32),
        grid_spec=pltpu.PrefetchScalarGridSpec(
            num_scalar_prefetch=0,
            grid=grid,
            in_specs=[
                pl.BlockSpec((tm, tk), lambda i, j, k: (i, k)),   # x tile
                pl.BlockSpec((tk, tn), lambda i, j, k: (k, j)),   # W^T tile
                pl.BlockSpec((1, tn), lambda i, j, k: (0, j)),    # bias strip
            ],
            out_specs=pl.BlockSpec((tm, tn), lambda i, j, k: (i, j)),
        ),
        compiler_params=pltpu.CompilerParams(
            dimension_semantics=("parallel", "parallel", "arbitrary"),
        ),
        cost_estimate=pl.CostEstimate(
            flops=2 * Bp * Fp * Op,
            transcendentals=0,
            bytes_accessed=4 * (Bp * Fp + Fp * Op + Bp * Op + Op),
        ),
    )(x_p, w_p, b_p)

    return out_p[:B, :O]


# ------------------------- Module-equivalent wrapper ------------------------ #
class LinearLayerWrapper:
    """JAX/Pallas port of musculoco_il.util.torch_models.LinearLayerWrapper."""

    def __init__(self, input_shape, output_shape, key, squeeze_out=False,
                 standardizer=None):
        assert len(input_shape) == len(output_shape) == 1
        self.input_shape = input_shape[0]
        self.output_shape = output_shape[0]
        self._squeeze_out = squeeze_out
        self._stand = standardizer

        k_w, k_b = jax.random.split(key)
        fan_in, fan_out = self.input_shape, self.output_shape
        # nn.init.xavier_uniform_ on weight (O, F)
        bound_w = (6.0 / (fan_in + fan_out)) ** 0.5
        w = jax.random.uniform(
            k_w, (fan_out, fan_in), jnp.float32, minval=-bound_w, maxval=bound_w
        )
        # default nn.Linear bias init: U(-1/sqrt(fan_in), 1/sqrt(fan_in))
        bound_b = 1.0 / (fan_in ** 0.5)
        b = jax.random.uniform(
            k_b, (fan_out,), jnp.float32, minval=-bound_b, maxval=bound_b
        )
        self.w_t = w.T  # (F, O) so the kernel output (B, O) is lane-dense
        self.b = b

    def __call__(self, *inputs, dim=1):
        # torch.cat(inputs, dim=dim)
        z = jnp.concatenate(inputs, axis=dim)
        # torch.squeeze(., 1): only squeezes if that axis has size 1
        if z.ndim > 1 and z.shape[1] == 1:
            z = jnp.squeeze(z, axis=1)
        if self._stand is not None:
            z = self._stand(z)
        z = z.astype(jnp.float32)  # inputs.float()

        squeeze_back = False
        if z.ndim == 1:            # degenerate case: treat as batch of 1
            z = z[None, :]
            squeeze_back = True

        # Hot path: tiled Pallas linear layer (single code path for all sizes).
        out = linear_pallas(z, self.w_t, self.b)

        if squeeze_back:
            out = out[0]
        if self._squeeze_out:
            out = jnp.squeeze(out)  # torch.squeeze(z): all size-1 dims
        return out


# ---------------------------------- Main ------------------------------------ #
if __name__ == "__main__":
    key = jax.random.PRNGKey(0)
    k_mod, k_x1, k_x2 = jax.random.split(key, 3)

    B, F1, F2, O = 2, 16, 16, 8  # total in-features = 32
    module = LinearLayerWrapper(
        input_shape=(F1 + F2,), output_shape=(O,), key=k_mod, squeeze_out=False
    )

    x1 = jax.random.normal(k_x1, (B, F1), jnp.float32)
    x2 = jax.random.normal(k_x2, (B, F2), jnp.float32)

    out = module(x1, x2, dim=1)
    out = jax.block_until_ready(out)

    # sanity check against plain-JAX reference of the same math
    x_cat = jnp.concatenate([x1, x2], axis=1).astype(jnp.float32)
    ref = x_cat @ module.w_t + module.b
    assert out.shape == (B, O)
    assert jnp.allclose(out, ref, atol=1e-4, rtol=1e-4)

    print("KERNEL_OK")
</pallas_src>

<mosaic_0001>
module attributes {stable_mosaic.version = 11 : i64} {
  func.func @_linear_bias_kernel(%arg0: i32, %arg1: i32, %arg2: i32, %arg3: memref<8x128xf32, #tpu.memory_space<vmem>>, %arg4: memref<128x128xf32, #tpu.memory_space<vmem>>, %arg5: memref<1x128xf32, #tpu.memory_space<vmem>>, %arg6: memref<8x128xf32, #tpu.memory_space<vmem>>) attributes {dimension_semantics = [#tpu.dimension_semantics<parallel>, #tpu.dimension_semantics<parallel>, #tpu.dimension_semantics<arbitrary>], iteration_bounds = array<i64: 1, 1, 1>, scalar_prefetch = 0 : i64, scratch_operands = 0 : i64, tpu.core_type = #tpu.core_type<tc>, window_params = [{transform_indices = @transform_0, window_bounds = array<i64: 8, 128>}, {transform_indices = @transform_1, window_bounds = array<i64: 128, 128>}, {transform_indices = @transform_2, window_bounds = array<i64: 1, 128>}, {transform_indices = @transform_3, window_bounds = array<i64: 8, 128>}]} {
    %c0_i32 = arith.constant 0 : i32
    %0 = arith.cmpi eq, %arg2, %c0_i32 : i32
    %1 = arith.extui %0 : i1 to i32
    %c0_i32_0 = arith.constant 0 : i32
    %2 = arith.cmpi ne, %1, %c0_i32_0 : i32
    scf.if %2 {
      %c0_8 = arith.constant 0 : index
      %c0_9 = arith.constant 0 : index
      %9 = vector.load %arg5[%c0_8, %c0_9] : memref<1x128xf32, #tpu.memory_space<vmem>>, vector<1x128xf32>
      %10 = vector.shape_cast %9 : vector<1x128xf32> to vector<1x128xf32>
      %11 = vector.broadcast %10 : vector<1x128xf32> to vector<8x128xf32>
      %c0_10 = arith.constant 0 : index
      %c0_11 = arith.constant 0 : index
      %12 = vector.load %arg6[%c0_10, %c0_11] : memref<8x128xf32, #tpu.memory_space<vmem>>, vector<8x128xf32>
      tpu.vector_store %arg6[%c0_10, %c0_11], %11 {strides = array<i32>} : memref<8x128xf32, #tpu.memory_space<vmem>>, vector<8x128xf32>,
    } else {
    }
    %c0 = arith.constant 0 : index
    %c0_1 = arith.constant 0 : index
    %3 = vector.load %arg6[%c0, %c0_1] : memref<8x128xf32, #tpu.memory_space<vmem>>, vector<8x128xf32>
    %c0_2 = arith.constant 0 : index
    %c0_3 = arith.constant 0 : index
    %4 = vector.load %arg3[%c0_2, %c0_3] : memref<8x128xf32, #tpu.memory_space<vmem>>, vector<8x128xf32>
    %c0_4 = arith.constant 0 : index
    %c0_5 = arith.constant 0 : index
    %5 = vector.load %arg4[%c0_4, %c0_5] : memref<128x128xf32, #tpu.memory_space<vmem>>, vector<128x128xf32>
    %cst = arith.constant dense<0.000000e+00> : vector<8x128xf32>
    %6 = tpu.matmul %4, %5, %cst {dimension_numbers = #tpu.dot_dimension_numbers<[1], [0], [0], [1], [0, 0, 1, 1], [], []>} : vector<8x128xf32>, vector<128x128xf32>, vector<8x128xf32> -> vector<8x128xf32>
    %7 = arith.addf %3, %6 : vector<8x128xf32>
    %c0_6 = arith.constant 0 : index
    %c0_7 = arith.constant 0 : index
    %8 = vector.load %arg6[%c0_6, %c0_7] : memref<8x128xf32, #tpu.memory_space<vmem>>, vector<8x128xf32>
    tpu.vector_store %arg6[%c0_6, %c0_7], %7 {strides = array<i32>} : memref<8x128xf32, #tpu.memory_space<vmem>>, vector<8x128xf32>,
    return
  }
  func.func @transform_0(%arg0: i32, %arg1: i32, %arg2: i32) -> (i32, i32) {
    %c0_i32 = arith.constant 0 : i32
    return %arg0, %arg2 : i32, i32
  }
  func.func @transform_1(%arg0: i32, %arg1: i32, %arg2: i32) -> (i32, i32) {
    %c0_i32 = arith.constant 0 : i32
    return %arg2, %arg1 : i32, i32
  }
  func.func @transform_2(%arg0: i32, %arg1: i32, %arg2: i32) -> (i32, i32) {
    %c0_i32 = arith.constant 0 : i32
    %c0_i32_0 = arith.constant 0 : i32
    return %c0_i32, %arg1 : i32, i32
  }
  func.func @transform_3(%arg0: i32, %arg1: i32, %arg2: i32) -> (i32, i32) {
    %c0_i32 = arith.constant 0 : i32
    return %arg0, %arg1 : i32, i32
  }
}

</mosaic_0001>

<llo_original>
// kernel: tpu_custom_call.1
$region0: #{tpu_custom_call.1}
  #allocation0 [shape = 'u32[]', space=smem, size = 0x4, offset = 0x4, fixed_abs, tag = 'smem constant byte address 0x4 - core index']
  #allocation1 [shape = 'u32[144,128]{1,0:T(1,128)}', space=vmem, size = 0x12000, scoped, tag = 'internal scratch']
  %s0 = inlined_call_operand.hbm [shape: f32[8,128], index: 0, kind: input, shape index: {}]
  %s1 = inlined_call_operand.hbm [shape: f32[128,128], index: 1, kind: input, shape index: {}]
  %s2 = inlined_call_operand.vmem [shape: f32[1,128], index: 2, kind: input, shape index: {}]
  %s3 = inlined_call_operand.hbm [shape: f32[8,128], index: 3, kind: output, shape index: {}]
  %s4 = sld [smem:[#allocation0]]
  $region34: #{tpu_custom_call.1} parent=0
    _
  %s6 = ssub.s32 1, %s4
  %s7 = scalar_select 0, %s6, %s4
  $region1: #{tpu_custom_call.1} parent=0
    #allocation2 [shape = 'u8[4096]{0}', space=vmem, size = 0x1000, scoped, tag = 'input window, operand 0, single buffered']
    #allocation3 [shape = 's32[1]{0}', space=sflag, size = 0x4, scoped, tag = 'scoped memory for tpu_custom_call.1']
    #allocation4 [shape = 's32[1]{0}', space=sflag, size = 0x4, scoped, tag = 'scoped memory for tpu_custom_call.1']
    #allocation5 [shape = 'u8[65536]{0}', space=vmem, size = 0x10000, scoped, tag = 'input window, operand 1, single buffered']
    #allocation6 [shape = 's32[1]{0}', space=sflag, size = 0x4, scoped, tag = 'scoped memory for tpu_custom_call.1']
    #allocation7 [shape = 'u8[4096]{0}', space=vmem, size = 0x1000, scoped, tag = 'output window, operand 0, single buffered']
    %8 = vsyncpa [#allocation3], 0
    %9 = vsyncpa [#allocation6], 0
    %10 = vsyncpa [#allocation4], 0
    // Predicated region
    $region2: #{tpu_custom_call.1} parent=1 // pred_check
      _
    $region3: #{tpu_custom_call.1} parent=1 // pred_check_branch
      %12 = sbr.rel (0) target = $region5
    $region4: #{tpu_custom_call.1} parent=1 // pred_region
      %s14 = ssub.s32 128, 128
      %15 = vsyncadd [#allocation3], %s14
      %s17 = sshll.u32 [#allocation2], 4
      %s18 = int_to_ptr.vmem [resolvable:$true] %s17
      %20 = dma.hbm_to_vmem [thread:$0]  %s0, 128, %s18, [#allocation3]
    $region5: #{tpu_custom_call.1} parent=1 // pred_fallthru
      _
    // Predicated region
    $region6: #{tpu_custom_call.1} parent=1 // pred_check
      _
    $region7: #{tpu_custom_call.1} parent=1 // pred_check_branch
      %22 = sbr.rel (0) target = $region9
    $region8: #{tpu_custom_call.1} parent=1 // pred_region
      %s24 = ssub.s32 2048, 2048
      %25 = vsyncadd [#allocation6], %s24
      %s26 = sshll.u32 [#allocation5], 4
      %s27 = int_to_ptr.vmem [resolvable:$true] %s26
      %32 = dma.hbm_to_vmem [thread:$0]  %s1, 2048, %s27, [#allocation6], 128, 128, 8
    $region9: #{tpu_custom_call.1} parent=1 // pred_fallthru
      _
    // Predicated region
    $region10: #{tpu_custom_call.1} parent=1 // pred_check
      _
    $region11: #{tpu_custom_call.1} parent=1 // pred_check_branch
      %34 = sbr.rel (0) target = $region13
    $region12: #{tpu_custom_call.1} parent=1 // pred_region
      _
    $region13: #{tpu_custom_call.1} parent=1 // pred_fallthru
      _
    // Predicated region
    $region14: #{tpu_custom_call.1} parent=1 // pred_check
      _
    $region15: #{tpu_custom_call.1} parent=1 // pred_check_branch
      %36 = sbr.rel (0) target = $region17
    $region16: #{tpu_custom_call.1} parent=1 // pred_region
      %37 = dma.done [#allocation3], 128
    $region17: #{tpu_custom_call.1} parent=1 // pred_fallthru
      _
    // Predicated region
    $region18: #{tpu_custom_call.1} parent=1 // pred_check
      _
    $region19: #{tpu_custom_call.1} parent=1 // pred_check_branch
      %39 = sbr.rel (0) target = $region21
    $region20: #{tpu_custom_call.1} parent=1 // pred_region
      %40 = dma.done [#allocation6], 2048
    $region21: #{tpu_custom_call.1} parent=1 // pred_fallthru
      _
    %p41 = scmp.eq.s32.totalorder 0, 0
    // Predicated region
    $region22: #{tpu_custom_call.1} parent=1 // pred_check
      %p42 = pneg %p41
    $region23: #{tpu_custom_call.1} parent=1 // pred_check_branch
      %44 = sbr.rel (%p42) target = $region25
    $region24: #{tpu_custom_call.1} parent=1 // pred_region
      %v45 = vld [vmem:[%s2] sm:$0x1]
      %v47 = vlaneseq
      %v48 = vshrl.u32 %v47, 7
      %v49 = vsub.s32 0, %v48
      %v50 = vrot.slane %v45, %v49
      %52 = vst [vmem:[#allocation7] sm:$0xff] %v50
    $region25: #{tpu_custom_call.1} parent=1 // pred_fallthru
      _
    %v53 = vld [vmem:[#allocation7] sm:$0xff]
    %v54 = vld [vmem:[#allocation2] sm:$0xff]
    %v55 = vld [vmem:[#allocation5] sm:$0xff]
    %v56 = vld [vmem:[#allocation5 + $0x8] sm:$0xff]
    %v57 = vld [vmem:[#allocation5 + $0x10] sm:$0xff]
    %v58 = vld [vmem:[#allocation5 + $0x18] sm:$0xff]
    %v59 = vld [vmem:[#allocation5 + $0x20] sm:$0xff]
    %v60 = vld [vmem:[#allocation5 + $0x28] sm:$0xff]
    %v61 = vld [vmem:[#allocation5 + $0x30] sm:$0xff]
    %v62 = vld [vmem:[#allocation5 + $0x38] sm:$0xff]
    %v63 = vld [vmem:[#allocation5 + $0x40] sm:$0xff]
    %v64 = vld [vmem:[#allocation5 + $0x48] sm:$0xff]
    %v65 = vld [vmem:[#allocation5 + $0x50] sm:$0xff]
    %v66 = vld [vmem:[#allocation5 + $0x58] sm:$0xff]
    %v67 = vld [vmem:[#allocation5 + $0x60] sm:$0xff]
    %v68 = vld [vmem:[#allocation5 + $0x68] sm:$0xff]
    %v69 = vld [vmem:[#allocation5 + $0x70] sm:$0xff]
    %v70 = vld [vmem:[#allocation5 + $0x78] sm:$0xff]
    %71 = vmatprep.subr.mxu0 0.0
    %72 = vmatpush1.msra.mxu0 %v70
    %73 = vmatprep.subr.mxu0 0.0
    %74 = vmatpush1.msra.mxu0 %v69
    %75 = vmatprep.subr.mxu0 0.0
    %76 = vmatpush1.msra.mxu0 %v68
    %77 = vmatprep.subr.mxu0 0.0
    %78 = vmatpush1.msra.mxu0 %v67
    %79 = vmatprep.subr.mxu0 0.0
    %80 = vmatpush1.msra.mxu0 %v66
    %81 = vmatprep.subr.mxu0 0.0
    %82 = vmatpush1.msra.mxu0 %v65
    %83 = vmatprep.subr.mxu0 0.0
    %84 = vmatpush1.msra.mxu0 %v64
    %85 = vmatprep.subr.mxu0 0.0
    %86 = vmatpush1.msra.mxu0 %v63
    %87 = vmatprep.subr.mxu0 0.0
    %88 = vmatpush1.msra.mxu0 %v62
    %89 = vmatprep.subr.mxu0 0.0
    %90 = vmatpush1.msra.mxu0 %v61
    %91 = vmatprep.subr.mxu0 0.0
    %92 = vmatpush1.msra.mxu0 %v60
    %93 = vmatprep.subr.mxu0 0.0
    %94 = vmatpush1.msra.mxu0 %v59
    %95 = vmatprep.subr.mxu0 0.0
    %96 = vmatpush1.msra.mxu0 %v58
    %97 = vmatprep.subr.mxu0 0.0
    %98 = vmatpush1.msra.mxu0 %v57
    %99 = vmatprep.subr.mxu0 0.0
    %100 = vmatpush1.msra.mxu0 %v56
    %101 = vmatprep.subr.mxu0 0.0
    %102 = vmatpush1.msra.mxu0 %v55
    %103 = vmatprep.subr.mxu0 0.0
    %104 = vmatpush2.msra.mxu0 0.0
    %105 = vmatprep.subr.mxu0 0.0
    %106 = vmatpush2.msra.mxu0 0.0
    %107 = vmatprep.subr.mxu0 0.0
    %108 = vmatpush2.msra.mxu0 0.0
    %109 = vmatprep.subr.mxu0 0.0
    %110 = vmatpush2.msra.mxu0 0.0
    %111 = vmatprep.subr.mxu0 0.0
    %112 = vmatpush2.msra.mxu0 0.0
    %113 = vmatprep.subr.mxu0 0.0
    %114 = vmatpush2.msra.mxu0 0.0
    %115 = vmatprep.subr.mxu0 0.0
    %116 = vmatpush2.msra.mxu0 0.0
    %117 = vmatprep.subr.mxu0 0.0
    %118 = vmatpush2.msra.mxu0 0.0
    %119 = vmatprep.subr.mxu0 0.0
    %120 = vmatpush2.msra.mxu0 0.0
    %121 = vmatprep.subr.mxu0 0.0
    %122 = vmatpush2.msra.mxu0 0.0
    %123 = vmatprep.subr.mxu0 0.0
    %124 = vmatpush2.msra.mxu0 0.0
    %125 = vmatprep.subr.mxu0 0.0
    %126 = vmatpush2.msra.mxu0 0.0
    %127 = vmatprep.subr.mxu0 0.0
    %128 = vmatpush2.msra.mxu0 0.0
    %129 = vmatprep.subr.mxu0 0.0
    %130 = vmatpush2.msra.mxu0 0.0
    %131 = vmatprep.subr.mxu0 0.0
    %132 = vmatpush2.msra.mxu0 0.0
    %133 = vmatprep.subr.mxu0 0.0
    %134 = vmatpush2.msra.mxu0 0.0
    %135 = vmatprep.mubr.f32.mxu0 0.0
    %136 = vmatmul.mubr.f32.gmra.mxu0 %v54
    %v137 = vpop.f32.mrf.mxu0
    %v138 = vadd.f32 0.0, %v137
    %v139 = vpop.f32.mrf.mxu0
    %140 = vdwg.mxu0
    %v141 = vadd.f32 %v53, %v138
    %142 = vst [vmem:[#allocation7] sm:$0xff] %v141
    // Predicated region
    $region26: #{tpu_custom_call.1} parent=1 // pred_check
      _
    $region27: #{tpu_custom_call.1} parent=1 // pred_check_branch
      %144 = sbr.rel (0) target = $region29
    $region28: #{tpu_custom_call.1} parent=1 // pred_region
      %s146 = ssub.s32 128, 128
      %147 = vsyncadd [#allocation4], %s146
      %s149 = sshll.u32 [#allocation7], 4
      %s150 = int_to_ptr.vmem [resolvable:$true] %s149
      %152 = dma.vmem_to_hbm [thread:$0]  %s150, 128, %s3, [#allocation4]
    $region29: #{tpu_custom_call.1} parent=1 // pred_fallthru
      _
    // Predicated region
    $region30: #{tpu_custom_call.1} parent=1 // pred_check
      _
    $region31: #{tpu_custom_call.1} parent=1 // pred_check_branch
      %154 = sbr.rel (0) target = $region33
    $region32: #{tpu_custom_call.1} parent=1 // pred_region
      %155 = dma.done [#allocation4], 128
    $region33: #{tpu_custom_call.1} parent=1 // pred_fallthru
      _
    %156 = vsyncpa [#allocation3], 1
    %157 = vsyncpa [#allocation6], 1
    %158 = vsyncpa [#allocation4], 1

</llo_original>
